<compile_context>
chip_gen: v7x
topology: tpu7x:2x2x1
jax: 0.10.0
libtpu: 0.0.40
codegen_flags: <defaults>
</compile_context>

<pallas_src>
import jax
import jax.numpy as jnp
from jax.experimental import pallas as pl
from jax.experimental.pallas import tpu as pltpu  # noqa: F401  (TPU backend registration)


def _concat_and_split_kernel(x_ref, cat_ref, s0_ref, s1_ref, s2_ref):
    # One read of x; four writes: cat(split(x, [1,1,1], 1), 1) == x, plus the
    # three per-channel slices.  All arrays are lane-dense (last dim = H*W).
    x = x_ref[...]                 # (N, C, HW)
    cat_ref[...] = x
    s0_ref[...] = x[:, 0, :]       # static sublane-axis slices of the loaded value
    s1_ref[...] = x[:, 1, :]
    s2_ref[...] = x[:, 2, :]


def model_forward(v1):
    """Returns (concatenated, (s0, s1, s2)) matching torch Model.forward."""
    N, C, H, W = v1.shape
    assert C == 3, "Model.forward splits dim=1 into [1, 1, 1] -> needs 3 channels"
    HW = H * W                      # 256 here -> multiple of 128 lanes

    x = v1.reshape(N, C, HW)        # lane-dense 3-D view

    spec_full = pl.BlockSpec((N, C, HW), lambda: (0, 0, 0))
    spec_split = pl.BlockSpec((N, HW), lambda: (0, 0))

    cat_flat, s0, s1, s2 = pl.pallas_call(
        _concat_and_split_kernel,
        out_shape=(
            jax.ShapeDtypeStruct((N, C, HW), v1.dtype),
            jax.ShapeDtypeStruct((N, HW), v1.dtype),
            jax.ShapeDtypeStruct((N, HW), v1.dtype),
            jax.ShapeDtypeStruct((N, HW), v1.dtype),
        ),
        # No grid: one block covering each (small) array.
        in_specs=[spec_full],
        out_specs=(spec_full, spec_split, spec_split, spec_split),
    )(x)

    concatenated = cat_flat.reshape(N, C, H, W)
    splits = tuple(s.reshape(N, 1, H, W) for s in (s0, s1, s2))
    return concatenated, splits


# TODO(synk): if scaled to large N/H/W, grid the row axis of an (N*C, H*W)
# view with lane-dense tiles (>=512 f32 lanes, rows a multiple of 8),
# dimension_semantics=("parallel",) so both v7x TensorCores drive HBM, and
# keep per-step footprint (4x block due to in/out double-buffering) well under
# the v7x 64 MiB VMEM / 32 MiB scoped default.


if __name__ == "__main__":
    key = jax.random.PRNGKey(0)

    # Small NCHW input; reference uses torch.randn(1, 3, 64, 64) — keep C=3
    # (required by the split) and shrink the rest.
    v1 = jax.random.normal(key, (2, 3, 16, 16), dtype=jnp.float32)

    fwd = jax.jit(model_forward)
    concatenated, splits = fwd(v1)
    jax.block_until_ready(concatenated)
    jax.block_until_ready(splits)

    # Correctness checks against the reference semantics.
    assert concatenated.shape == v1.shape
    assert jnp.array_equal(concatenated, v1)
    for i, s in enumerate(splits):
        assert s.shape == (v1.shape[0], 1, v1.shape[2], v1.shape[3])
        assert jnp.array_equal(s, v1[:, i : i + 1])

    print("KERNEL_OK")
</pallas_src>

<mosaic_0001>
module attributes {stable_mosaic.version = 11 : i64} {
  func.func @_concat_and_split_kernel(%arg0: memref<2x3x256xf32, #tpu.memory_space<vmem>>, %arg1: memref<2x3x256xf32, #tpu.memory_space<vmem>>, %arg2: memref<2x256xf32, #tpu.memory_space<vmem>>, %arg3: memref<2x256xf32, #tpu.memory_space<vmem>>, %arg4: memref<2x256xf32, #tpu.memory_space<vmem>>) attributes {dimension_semantics = [], scalar_prefetch = 0 : i64, scratch_operands = 0 : i64, tpu.core_type = #tpu.core_type<tc>} {
    %c0 = arith.constant 0 : index
    %c0_0 = arith.constant 0 : index
    %c0_1 = arith.constant 0 : index
    %0 = vector.load %arg0[%c0, %c0_0, %c0_1] : memref<2x3x256xf32, #tpu.memory_space<vmem>>, vector<2x3x256xf32>
    %c0_2 = arith.constant 0 : index
    %c0_3 = arith.constant 0 : index
    %c0_4 = arith.constant 0 : index
    %1 = vector.load %arg1[%c0_2, %c0_3, %c0_4] : memref<2x3x256xf32, #tpu.memory_space<vmem>>, vector<2x3x256xf32>
    tpu.vector_store %arg1[%c0_2, %c0_3, %c0_4], %0 {strides = array<i32>} : memref<2x3x256xf32, #tpu.memory_space<vmem>>, vector<2x3x256xf32>,
    %2 = vector.extract_strided_slice %0 {offsets = [0, 0, 0], sizes = [2, 1, 256], strides = [1, 1, 1]} : vector<2x3x256xf32> to vector<2x1x256xf32>
    %3 = vector.shape_cast %2 : vector<2x1x256xf32> to vector<2x256xf32>
    %c0_5 = arith.constant 0 : index
    %c0_6 = arith.constant 0 : index
    %4 = vector.load %arg2[%c0_5, %c0_6] : memref<2x256xf32, #tpu.memory_space<vmem>>, vector<2x256xf32>
    tpu.vector_store %arg2[%c0_5, %c0_6], %3 {strides = array<i32>} : memref<2x256xf32, #tpu.memory_space<vmem>>, vector<2x256xf32>,
    %5 = vector.extract_strided_slice %0 {offsets = [0, 1, 0], sizes = [2, 1, 256], strides = [1, 1, 1]} : vector<2x3x256xf32> to vector<2x1x256xf32>
    %6 = vector.shape_cast %5 : vector<2x1x256xf32> to vector<2x256xf32>
    %c0_7 = arith.constant 0 : index
    %c0_8 = arith.constant 0 : index
    %7 = vector.load %arg3[%c0_7, %c0_8] : memref<2x256xf32, #tpu.memory_space<vmem>>, vector<2x256xf32>
    tpu.vector_store %arg3[%c0_7, %c0_8], %6 {strides = array<i32>} : memref<2x256xf32, #tpu.memory_space<vmem>>, vector<2x256xf32>,
    %8 = vector.extract_strided_slice %0 {offsets = [0, 2, 0], sizes = [2, 1, 256], strides = [1, 1, 1]} : vector<2x3x256xf32> to vector<2x1x256xf32>
    %9 = vector.shape_cast %8 : vector<2x1x256xf32> to vector<2x256xf32>
    %c0_9 = arith.constant 0 : index
    %c0_10 = arith.constant 0 : index
    %10 = vector.load %arg4[%c0_9, %c0_10] : memref<2x256xf32, #tpu.memory_space<vmem>>, vector<2x256xf32>
    tpu.vector_store %arg4[%c0_9, %c0_10], %9 {strides = array<i32>} : memref<2x256xf32, #tpu.memory_space<vmem>>, vector<2x256xf32>,
    return
  }
}

</mosaic_0001>

<llo_original>
// kernel: model_forward.1
$region0: #{model_forward.1}
  #allocation0 [shape = 'u32[]', space=smem, size = 0x4, offset = 0x4, fixed_abs, tag = 'smem constant byte address 0x4 - core index']
  #allocation1 [shape = 'u32[144,128]{1,0:T(1,128)}', space=vmem, size = 0x12000, scoped, tag = 'internal scratch']
  %s0 = inlined_call_operand.vmem [shape: f32[2,3,256], index: 0, kind: input, shape index: {}]
  %s1 = inlined_call_operand.vmem [shape: f32[2,3,256], index: 1, kind: output, shape index: {0}]
  %s2 = inlined_call_operand.vmem [shape: f32[2,256], index: 2, kind: output, shape index: {1}]
  %s3 = inlined_call_operand.vmem [shape: f32[2,256], index: 3, kind: output, shape index: {2}]
  %s4 = inlined_call_operand.vmem [shape: f32[2,256], index: 4, kind: output, shape index: {3}]
  %5 = xla_tuple %s1, %s2, %s3, %s4
  %s6 = sld [smem:[#allocation0]]
  $region38: #{model_forward.1} parent=0
    _
  %s8 = ssub.s32 1, %s6
  %s9 = scalar_select 0, %s8, %s6
  // Predicated region
  $region2: #{model_forward.1} parent=0 // pred_check
    _
  $region3: #{model_forward.1} parent=0 // pred_check_branch
    %11 = sbr.rel (0) target = $region5
  $region4: #{model_forward.1} parent=0 // pred_region
    _
  $region5: #{model_forward.1} parent=0 // pred_fallthru
    _
  %v12 = vld [vmem:[%s0] sm:$0x77]
  %v13 = vld [vmem:[%s0 + $0x8] sm:$0x77]
  %14 = vst [vmem:[%s1] sm:$0x77] %v12
  %15 = vst [vmem:[%s1 + $0x8] sm:$0x77] %v13
  %v19 = vunpack.c.l.s4 1983009808
  %v20 = vunpack.c.0.s8 %v19
  %v21 = vlaneseq
  %v22 = vshrl.u32 %v21, 7
  %v23 = vsub.s32 %v20, %v22
  %v24 = vrot.slane %v12, %v23
  %v26 = vunpack.c.l.s4 1983009808
  %v27 = vunpack.c.0.s8 %v26
  %v28 = vlaneseq
  %v29 = vshrl.u32 %v28, 7
  %v30 = vsub.s32 %v27, %v29
  %v31 = vrot.slane %v13, %v30
  %vm32 = vcmask 1044484
  %v33 = vsel %vm32, %v24, %v24
  %vm34 = vcmask 1046534
  %v35 = vsel %vm34, %v24, %v33
  %v36 = vrot.slane %v31, 7
  %vm37 = vcmask 1041409
  %v38 = vsel %vm37, %v36, %v35
  %vm39 = vcmask 1043459
  %v40 = vsel %vm39, %v36, %v38
  %vm41 = vcmask 1045509
  %v42 = vsel %vm41, %v36, %v40
  %vm43 = vcmask 1047559
  %v44 = vsel %vm43, %v36, %v42
  %46 = vst [vmem:[%s2] sm:$0xf] %v44
  %v47 = vrot.slane %v24, 1
  %v48 = vsel %vm32, %v47, %v47
  %v49 = vsel %vm34, %v47, %v48
  %v50 = vsel %vm37, %v31, %v49
  %v51 = vsel %vm39, %v31, %v50
  %v52 = vsel %vm41, %v31, %v51
  %v53 = vsel %vm43, %v31, %v52
  %55 = vst [vmem:[%s3] sm:$0xf] %v53
  %v56 = vcombine.high %v24, %v24
  %v57 = vcombine.high %v31, %v31
  %v58 = vsel %vm32, %v56, %v56
  %v59 = vsel %vm34, %v56, %v58
  %v60 = vrot.slane %v57, 7
  %v61 = vsel %vm37, %v60, %v59
  %v62 = vsel %vm39, %v60, %v61
  %v63 = vsel %vm41, %v60, %v62
  %v64 = vsel %vm43, %v60, %v63
  %66 = vst [vmem:[%s4] sm:$0xf] %v64
  // Predicated region
  $region6: #{model_forward.1} parent=0 // pred_check
    _
  $region7: #{model_forward.1} parent=0 // pred_check_branch
    %68 = sbr.rel (0) target = $region9
  $region8: #{model_forward.1} parent=0 // pred_region
    _
  $region9: #{model_forward.1} parent=0 // pred_fallthru
    _
  // Predicated region
  $region10: #{model_forward.1} parent=0 // pred_check
    _
  $region11: #{model_forward.1} parent=0 // pred_check_branch
    %70 = sbr.rel (0) target = $region13
  $region12: #{model_forward.1} parent=0 // pred_region
    _
  $region13: #{model_forward.1} parent=0 // pred_fallthru
    _
  // Predicated region
  $region14: #{model_forward.1} parent=0 // pred_check
    _
  $region15: #{model_forward.1} parent=0 // pred_check_branch
    %72 = sbr.rel (0) target = $region17
  $region16: #{model_forward.1} parent=0 // pred_region
    _
  $region17: #{model_forward.1} parent=0 // pred_fallthru
    _
  // Predicated region
  $region18: #{model_forward.1} parent=0 // pred_check
    _
  $region19: #{model_forward.1} parent=0 // pred_check_branch
    %74 = sbr.rel (0) target = $region21
  $region20: #{model_forward.1} parent=0 // pred_region
    _
  $region21: #{model_forward.1} parent=0 // pred_fallthru
    _
  // Predicated region
  $region22: #{model_forward.1} parent=0 // pred_check
    _
  $region23: #{model_forward.1} parent=0 // pred_check_branch
    %76 = sbr.rel (0) target = $region25
  $region24: #{model_forward.1} parent=0 // pred_region
    _
  $region25: #{model_forward.1} parent=0 // pred_fallthru
    _
  // Predicated region
  $region26: #{model_forward.1} parent=0 // pred_check
    _
  $region27: #{model_forward.1} parent=0 // pred_check_branch
    %78 = sbr.rel (0) target = $region29
  $region28: #{model_forward.1} parent=0 // pred_region
    _
  $region29: #{model_forward.1} parent=0 // pred_fallthru
    _
  // Predicated region
  $region30: #{model_forward.1} parent=0 // pred_check
    _
  $region31: #{model_forward.1} parent=0 // pred_check_branch
    %80 = sbr.rel (0) target = $region33
  $region32: #{model_forward.1} parent=0 // pred_region
    _
  $region33: #{model_forward.1} parent=0 // pred_fallthru
    _
  // Predicated region
  $region34: #{model_forward.1} parent=0 // pred_check
    _
  $region35: #{model_forward.1} parent=0 // pred_check_branch
    %82 = sbr.rel (0) target = $region37
  $region36: #{model_forward.1} parent=0 // pred_region
    _
  $region37: #{model_forward.1} parent=0 // pred_fallthru
    _

</llo_original>
